<compile_context>
chip_gen: v7x
topology: tpu7x:2x2x1
jax: 0.10.0
libtpu: 0.0.40
codegen_flags: <defaults>
</compile_context>

<pallas_src>
import jax
import jax.numpy as jnp
from jax import lax
from jax.experimental import pallas as pl
from jax.experimental.pallas import tpu as pltpu

LANES = 128


def _round_up(x, m):
    return ((x + m - 1) // m) * m


def qnet_kernel(x_ref, w_in_ref, b_in_ref, w_h_ref, b_h_ref,
                w_out_ref, b_out_ref, out_ref):
    bf16 = jnp.bfloat16
    x = x_ref[...]                                                # (TB, S) f32

    # input head: bf16 MXU matmul, f32 accumulate + f32 bias
    h = jnp.dot(x.astype(bf16), w_in_ref[...],
                preferred_element_type=jnp.float32) + b_in_ref[...]   # (TB, N)

    # hidden layers: Linear + ReLU (static unroll; n_hidden is small)
    n_hidden = w_h_ref.shape[0]
    for layer in range(n_hidden):
        h = jnp.dot(h.astype(bf16), w_h_ref[layer],
                    preferred_element_type=jnp.float32) + b_h_ref[layer]
        h = jnp.maximum(h, 0.0)                                   # f32 ReLU (VPU)

    # output head: weights lane-padded to 128 in the wrapper -> lane-dense store
    y = jnp.dot(h.astype(bf16), w_out_ref[...],
                preferred_element_type=jnp.float32) + b_out_ref[...]  # (TB, 128)

    # inventory masking: columns >= int(states[:, -1]) become -inf.
    # Kept 2-D: (TB, 1) vs (TB, 128) iota. Padded lanes are sliced away later.
    inv = x[:, -1:].astype(jnp.int32)                             # (TB, 1)
    cols = lax.broadcasted_iota(jnp.int32, y.shape, dimension=1)
    out_ref[...] = jnp.where(cols >= inv, -jnp.inf, y)


def qnet_forward(states, params, *, tile_b=512):
    """states: (B, state_size) float32. params: dict of pre-transposed (in, out) weights."""
    B, S = states.shape
    n_nodes, out_dim = params["w_out"].shape
    out_pad = _round_up(out_dim, LANES)                           # lane-dense width

    bf16 = jnp.bfloat16
    # Pre-cast weights to bf16 (MXU input dtype); biases stay f32.
    w_in = params["w_in"].astype(bf16)
    w_h = params["w_h"].astype(bf16)
    # Pad output head to 128 lanes (zero columns -> no effect on real outputs).
    w_out = jnp.pad(params["w_out"], ((0, 0), (0, out_pad - out_dim))).astype(bf16)
    b_out = jnp.pad(params["b_out"], ((0, 0), (0, out_pad - out_dim)))
    b_in, b_h = params["b_in"], params["b_h"]

    # Batch tiling: clamp tile for small batches, zero-pad batch to a tile multiple.
    tile_b = max(8, min(tile_b, _round_up(B, 8)))
    b_pad = _round_up(B, tile_b)
    states_p = jnp.pad(states, ((0, b_pad - B), (0, 0))) if b_pad != B else states

    grid = (b_pad // tile_b,)
    const2 = lambda i: (0, 0)        # weights/biases resident: constant index_map
    const3 = lambda i: (0, 0, 0)

    out = pl.pallas_call(
        qnet_kernel,
        out_shape=jax.ShapeDtypeStruct((b_pad, out_pad), jnp.float32),
        grid=grid,
        in_specs=[
            pl.BlockSpec((tile_b, S), lambda i: (i, 0)),          # states (tiled)
            pl.BlockSpec(w_in.shape, const2),                     # w_in  (resident)
            pl.BlockSpec(b_in.shape, const2),                     # b_in
            pl.BlockSpec(w_h.shape, const3),                      # w_h (stacked)
            pl.BlockSpec(b_h.shape, const3),                      # b_h (stacked)
            pl.BlockSpec(w_out.shape, const2),                    # w_out (lane-padded)
            pl.BlockSpec(b_out.shape, const2),                    # b_out (lane-padded)
        ],
        out_specs=pl.BlockSpec((tile_b, out_pad), lambda i: (i, 0)),
        compiler_params=pltpu.CompilerParams(
            dimension_semantics=("parallel",)),                   # megacore on v7x
    )(states_p, w_in, b_in, w_h, b_h, w_out, b_out)

    return out[:B, :out_dim]


def init_params(key, action_size=20, state_size=5, n_nodes=20, n_layers=6):
    """Deterministic synthetic init (PyTorch-style uniform ranges), pre-transposed (in, out)."""
    n_hidden = n_layers - 2
    ks = jax.random.split(key, 6)

    def unif(k, shape, fan_in):
        bound = 1.0 / jnp.sqrt(fan_in)
        return jax.random.uniform(k, shape, jnp.float32, -bound, bound)

    return {
        "w_in":  unif(ks[0], (state_size, n_nodes), state_size),
        "b_in":  unif(ks[1], (1, n_nodes), state_size),
        "w_h":   unif(ks[2], (n_hidden, n_nodes, n_nodes), n_nodes),
        "b_h":   unif(ks[3], (n_hidden, 1, n_nodes), n_nodes),
        "w_out": unif(ks[4], (n_nodes, action_size + 1), n_nodes),
        "b_out": unif(ks[5], (1, action_size + 1), n_nodes),
    }


def qnet_reference(states, params):
    """Pure-JAX f32 reference (true module semantics)."""
    h = states @ params["w_in"] + params["b_in"]
    for layer in range(params["w_h"].shape[0]):
        h = jnp.maximum(h @ params["w_h"][layer] + params["b_h"][layer], 0.0)
    y = h @ params["w_out"] + params["b_out"]
    inv = states[:, -1:].astype(jnp.int32)
    cols = lax.broadcasted_iota(jnp.int32, y.shape, 1)
    return jnp.where(cols >= inv, -jnp.inf, y)


def qnet_reference_bf16(states, params):
    """Pure-JAX reference mimicking the kernel's bf16-matmul / f32-accumulate numerics."""
    bf16 = jnp.bfloat16
    h = jnp.dot(states.astype(bf16), params["w_in"].astype(bf16),
                preferred_element_type=jnp.float32) + params["b_in"]
    for layer in range(params["w_h"].shape[0]):
        h = jnp.dot(h.astype(bf16), params["w_h"][layer].astype(bf16),
                    preferred_element_type=jnp.float32) + params["b_h"][layer]
        h = jnp.maximum(h, 0.0)
    y = jnp.dot(h.astype(bf16), params["w_out"].astype(bf16),
                preferred_element_type=jnp.float32) + params["b_out"]
    inv = states[:, -1:].astype(jnp.int32)
    cols = lax.broadcasted_iota(jnp.int32, y.shape, 1)
    return jnp.where(cols >= inv, -jnp.inf, y)


if __name__ == "__main__":
    action_size, state_size, n_nodes, n_layers = 20, 5, 20, 6
    batch, tile_b = 64, 16   # small demo shapes; grid = (4,). Use tile_b>=512 in production.

    key = jax.random.PRNGKey(0)
    k_params, k_state, k_inv = jax.random.split(key, 3)

    params = init_params(k_params, action_size, state_size, n_nodes, n_layers)

    # states: arbitrary features, last column is "inventory" (non-negative int)
    states = jax.random.normal(k_state, (batch, state_size), jnp.float32)
    inventory = jax.random.randint(k_inv, (batch,), 1, action_size + 1)
    states = states.at[:, -1].set(inventory.astype(jnp.float32))

    out = jax.block_until_ready(qnet_forward(states, params, tile_b=tile_b))
    assert out.shape == (batch, action_size + 1)

    ref_f32 = qnet_reference(states, params)
    ref_bf16 = qnet_reference_bf16(states, params)

    finite = jnp.isfinite(ref_f32)
    # 1) -inf mask pattern must match the module exactly
    assert bool(jnp.all(jnp.isfinite(out) == finite))
    # 2) tight check against a reference with the same bf16-matmul numerics
    assert bool(jnp.allclose(jnp.where(finite, out, 0.0),
                             jnp.where(finite, ref_bf16, 0.0),
                             atol=2e-2, rtol=2e-2))
    # 3) loose sanity check against the true f32 module semantics (bf16 matmul error)
    assert bool(jnp.allclose(jnp.where(finite, out, 0.0),
                             jnp.where(finite, ref_f32, 0.0),
                             atol=3e-1, rtol=5e-2))

    print("KERNEL_OK")
</pallas_src>

<mosaic_0001>
module attributes {stable_mosaic.version = 11 : i64} {
  func.func @qnet_kernel(%arg0: i32, %arg1: memref<16x5xf32, #tpu.memory_space<vmem>>, %arg2: memref<5x20xbf16, #tpu.memory_space<vmem>>, %arg3: memref<1x20xf32, #tpu.memory_space<vmem>>, %arg4: memref<4x20x20xbf16, #tpu.memory_space<vmem>>, %arg5: memref<4x1x20xf32, #tpu.memory_space<vmem>>, %arg6: memref<20x128xbf16, #tpu.memory_space<vmem>>, %arg7: memref<1x128xf32, #tpu.memory_space<vmem>>, %arg8: memref<16x128xf32, #tpu.memory_space<vmem>>) attributes {dimension_semantics = [#tpu.dimension_semantics<parallel>], iteration_bounds = array<i64: 4>, scalar_prefetch = 0 : i64, scratch_operands = 0 : i64, tpu.core_type = #tpu.core_type<tc>, window_params = [{transform_indices = @transform_0, window_bounds = array<i64: 16, 5>}, {pipeline_mode = #tpu.pipeline_mode<synchronous>, transform_indices = @transform_1, window_bounds = array<i64: 5, 20>}, {pipeline_mode = #tpu.pipeline_mode<synchronous>, transform_indices = @transform_2, window_bounds = array<i64: 1, 20>}, {pipeline_mode = #tpu.pipeline_mode<synchronous>, transform_indices = @transform_3, window_bounds = array<i64: 4, 20, 20>}, {pipeline_mode = #tpu.pipeline_mode<synchronous>, transform_indices = @transform_4, window_bounds = array<i64: 4, 1, 20>}, {pipeline_mode = #tpu.pipeline_mode<synchronous>, transform_indices = @transform_5, window_bounds = array<i64: 20, 128>}, {pipeline_mode = #tpu.pipeline_mode<synchronous>, transform_indices = @transform_6, window_bounds = array<i64: 1, 128>}, {transform_indices = @transform_7, window_bounds = array<i64: 16, 128>}]} {
    %c0 = arith.constant 0 : index
    %c0_0 = arith.constant 0 : index
    %0 = vector.load %arg1[%c0, %c0_0] : memref<16x5xf32, #tpu.memory_space<vmem>>, vector<16x5xf32>
    %1 = arith.truncf %0 : vector<16x5xf32> to vector<16x5xbf16>
    %c0_1 = arith.constant 0 : index
    %c0_2 = arith.constant 0 : index
    %2 = vector.load %arg2[%c0_1, %c0_2] : memref<5x20xbf16, #tpu.memory_space<vmem>>, vector<5x20xbf16>
    %cst = arith.constant dense<0.000000e+00> : vector<16x20xf32>
    %3 = tpu.matmul %1, %2, %cst {dimension_numbers = #tpu.dot_dimension_numbers<[1], [0], [0], [1], [0, 0, 1, 1], [], []>} : vector<16x5xbf16>, vector<5x20xbf16>, vector<16x20xf32> -> vector<16x20xf32>
    %c0_3 = arith.constant 0 : index
    %c0_4 = arith.constant 0 : index
    %4 = vector.load %arg3[%c0_3, %c0_4] : memref<1x20xf32, #tpu.memory_space<vmem>>, vector<1x20xf32>
    %5 = vector.broadcast %4 : vector<1x20xf32> to vector<16x20xf32>
    %6 = arith.addf %3, %5 : vector<16x20xf32>
    %7 = arith.truncf %6 : vector<16x20xf32> to vector<16x20xbf16>
    %c0_5 = arith.constant 0 : index
    %c0_6 = arith.constant 0 : index
    %c0_7 = arith.constant 0 : index
    %8 = vector.load %arg4[%c0_5, %c0_6, %c0_7] : memref<4x20x20xbf16, #tpu.memory_space<vmem>>, vector<1x20x20xbf16>
    %9 = vector.shape_cast %8 : vector<1x20x20xbf16> to vector<20x20xbf16>
    %cst_8 = arith.constant dense<0.000000e+00> : vector<16x20xf32>
    %10 = tpu.matmul %7, %9, %cst_8 {dimension_numbers = #tpu.dot_dimension_numbers<[1], [0], [0], [1], [0, 0, 1, 1], [], []>} : vector<16x20xbf16>, vector<20x20xbf16>, vector<16x20xf32> -> vector<16x20xf32>
    %c0_9 = arith.constant 0 : index
    %c0_10 = arith.constant 0 : index
    %c0_11 = arith.constant 0 : index
    %11 = vector.load %arg5[%c0_9, %c0_10, %c0_11] : memref<4x1x20xf32, #tpu.memory_space<vmem>>, vector<1x1x20xf32>
    %12 = vector.shape_cast %11 : vector<1x1x20xf32> to vector<1x20xf32>
    %13 = vector.broadcast %12 : vector<1x20xf32> to vector<16x20xf32>
    %14 = arith.addf %10, %13 : vector<16x20xf32>
    %cst_12 = arith.constant 0.000000e+00 : f32
    %15 = vector.broadcast %cst_12 : f32 to vector<16x20xf32>
    %16 = arith.maximumf %14, %15 : vector<16x20xf32>
    %17 = arith.truncf %16 : vector<16x20xf32> to vector<16x20xbf16>
    %c1 = arith.constant 1 : index
    %c0_13 = arith.constant 0 : index
    %c0_14 = arith.constant 0 : index
    %18 = vector.load %arg4[%c1, %c0_13, %c0_14] : memref<4x20x20xbf16, #tpu.memory_space<vmem>>, vector<1x20x20xbf16>
    %19 = vector.shape_cast %18 : vector<1x20x20xbf16> to vector<20x20xbf16>
    %cst_15 = arith.constant dense<0.000000e+00> : vector<16x20xf32>
    %20 = tpu.matmul %17, %19, %cst_15 {dimension_numbers = #tpu.dot_dimension_numbers<[1], [0], [0], [1], [0, 0, 1, 1], [], []>} : vector<16x20xbf16>, vector<20x20xbf16>, vector<16x20xf32> -> vector<16x20xf32>
    %c1_16 = arith.constant 1 : index
    %c0_17 = arith.constant 0 : index
    %c0_18 = arith.constant 0 : index
    %21 = vector.load %arg5[%c1_16, %c0_17, %c0_18] : memref<4x1x20xf32, #tpu.memory_space<vmem>>, vector<1x1x20xf32>
    %22 = vector.shape_cast %21 : vector<1x1x20xf32> to vector<1x20xf32>
    %23 = vector.broadcast %22 : vector<1x20xf32> to vector<16x20xf32>
    %24 = arith.addf %20, %23 : vector<16x20xf32>
    %cst_19 = arith.constant 0.000000e+00 : f32
    %25 = vector.broadcast %cst_19 : f32 to vector<16x20xf32>
    %26 = arith.maximumf %24, %25 : vector<16x20xf32>
    %27 = arith.truncf %26 : vector<16x20xf32> to vector<16x20xbf16>
    %c2 = arith.constant 2 : index
    %c0_20 = arith.constant 0 : index
    %c0_21 = arith.constant 0 : index
    %28 = vector.load %arg4[%c2, %c0_20, %c0_21] : memref<4x20x20xbf16, #tpu.memory_space<vmem>>, vector<1x20x20xbf16>
    %29 = vector.shape_cast %28 : vector<1x20x20xbf16> to vector<20x20xbf16>
    %cst_22 = arith.constant dense<0.000000e+00> : vector<16x20xf32>
    %30 = tpu.matmul %27, %29, %cst_22 {dimension_numbers = #tpu.dot_dimension_numbers<[1], [0], [0], [1], [0, 0, 1, 1], [], []>} : vector<16x20xbf16>, vector<20x20xbf16>, vector<16x20xf32> -> vector<16x20xf32>
    %c2_23 = arith.constant 2 : index
    %c0_24 = arith.constant 0 : index
    %c0_25 = arith.constant 0 : index
    %31 = vector.load %arg5[%c2_23, %c0_24, %c0_25] : memref<4x1x20xf32, #tpu.memory_space<vmem>>, vector<1x1x20xf32>
    %32 = vector.shape_cast %31 : vector<1x1x20xf32> to vector<1x20xf32>
    %33 = vector.broadcast %32 : vector<1x20xf32> to vector<16x20xf32>
    %34 = arith.addf %30, %33 : vector<16x20xf32>
    %cst_26 = arith.constant 0.000000e+00 : f32
    %35 = vector.broadcast %cst_26 : f32 to vector<16x20xf32>
    %36 = arith.maximumf %34, %35 : vector<16x20xf32>
    %37 = arith.truncf %36 : vector<16x20xf32> to vector<16x20xbf16>
    %c3 = arith.constant 3 : index
    %c0_27 = arith.constant 0 : index
    %c0_28 = arith.constant 0 : index
    %38 = vector.load %arg4[%c3, %c0_27, %c0_28] : memref<4x20x20xbf16, #tpu.memory_space<vmem>>, vector<1x20x20xbf16>
    %39 = vector.shape_cast %38 : vector<1x20x20xbf16> to vector<20x20xbf16>
    %cst_29 = arith.constant dense<0.000000e+00> : vector<16x20xf32>
    %40 = tpu.matmul %37, %39, %cst_29 {dimension_numbers = #tpu.dot_dimension_numbers<[1], [0], [0], [1], [0, 0, 1, 1], [], []>} : vector<16x20xbf16>, vector<20x20xbf16>, vector<16x20xf32> -> vector<16x20xf32>
    %c3_30 = arith.constant 3 : index
    %c0_31 = arith.constant 0 : index
    %c0_32 = arith.constant 0 : index
    %41 = vector.load %arg5[%c3_30, %c0_31, %c0_32] : memref<4x1x20xf32, #tpu.memory_space<vmem>>, vector<1x1x20xf32>
    %42 = vector.shape_cast %41 : vector<1x1x20xf32> to vector<1x20xf32>
    %43 = vector.broadcast %42 : vector<1x20xf32> to vector<16x20xf32>
    %44 = arith.addf %40, %43 : vector<16x20xf32>
    %cst_33 = arith.constant 0.000000e+00 : f32
    %45 = vector.broadcast %cst_33 : f32 to vector<16x20xf32>
    %46 = arith.maximumf %44, %45 : vector<16x20xf32>
    %47 = arith.truncf %46 : vector<16x20xf32> to vector<16x20xbf16>
    %c0_34 = arith.constant 0 : index
    %c0_35 = arith.constant 0 : index
    %48 = vector.load %arg6[%c0_34, %c0_35] : memref<20x128xbf16, #tpu.memory_space<vmem>>, vector<20x128xbf16>
    %cst_36 = arith.constant dense<0.000000e+00> : vector<16x128xf32>
    %49 = tpu.matmul %47, %48, %cst_36 {dimension_numbers = #tpu.dot_dimension_numbers<[1], [0], [0], [1], [0, 0, 1, 1], [], []>} : vector<16x20xbf16>, vector<20x128xbf16>, vector<16x128xf32> -> vector<16x128xf32>
    %c0_37 = arith.constant 0 : index
    %c0_38 = arith.constant 0 : index
    %50 = vector.load %arg7[%c0_37, %c0_38] : memref<1x128xf32, #tpu.memory_space<vmem>>, vector<1x128xf32>
    %51 = vector.broadcast %50 : vector<1x128xf32> to vector<16x128xf32>
    %52 = arith.addf %49, %51 : vector<16x128xf32>
    %53 = vector.extract_strided_slice %0 {offsets = [0, 4], sizes = [16, 1], strides = [1, 1]} : vector<16x5xf32> to vector<16x1xf32>
    %54 = arith.fptosi %53 : vector<16x1xf32> to vector<16x1xi32>
    %55 = tpu.iota {dimensions = array<i32: 1>} : vector<16x128xi32>
    %56 = vector.broadcast %54 : vector<16x1xi32> to vector<16x128xi32>
    %57 = arith.cmpi sge, %55, %56 : vector<16x128xi32>
    %cst_39 = arith.constant 0xFF800000 : f32
    %58 = vector.broadcast %cst_39 : f32 to vector<16x128xf32>
    %59 = arith.select %57, %58, %52 : vector<16x128xi1>, vector<16x128xf32>
    %c0_40 = arith.constant 0 : index
    %c0_41 = arith.constant 0 : index
    %60 = vector.load %arg8[%c0_40, %c0_41] : memref<16x128xf32, #tpu.memory_space<vmem>>, vector<16x128xf32>
    tpu.vector_store %arg8[%c0_40, %c0_41], %59 {strides = array<i32>} : memref<16x128xf32, #tpu.memory_space<vmem>>, vector<16x128xf32>,
    return
  }
  func.func @transform_0(%arg0: i32) -> (i32, i32) {
    %c0_i32 = arith.constant 0 : i32
    %c0_i32_0 = arith.constant 0 : i32
    return %arg0, %c0_i32 : i32, i32
  }
  func.func @transform_1(%arg0: i32) -> (i32, i32) {
    %c0_i32 = arith.constant 0 : i32
    %c0_i32_0 = arith.constant 0 : i32
    %c0_i32_1 = arith.constant 0 : i32
    return %c0_i32, %c0_i32_0 : i32, i32
  }
  func.func @transform_2(%arg0: i32) -> (i32, i32) {
    %c0_i32 = arith.constant 0 : i32
    %c0_i32_0 = arith.constant 0 : i32
    %c0_i32_1 = arith.constant 0 : i32
    return %c0_i32, %c0_i32_0 : i32, i32
  }
  func.func @transform_3(%arg0: i32) -> (i32, i32, i32) {
    %c0_i32 = arith.constant 0 : i32
    %c0_i32_0 = arith.constant 0 : i32
    %c0_i32_1 = arith.constant 0 : i32
    %c0_i32_2 = arith.constant 0 : i32
    return %c0_i32, %c0_i32_0, %c0_i32_1 : i32, i32, i32
  }
  func.func @transform_4(%arg0: i32) -> (i32, i32, i32) {
    %c0_i32 = arith.constant 0 : i32
    %c0_i32_0 = arith.constant 0 : i32
    %c0_i32_1 = arith.constant 0 : i32
    %c0_i32_2 = arith.constant 0 : i32
    return %c0_i32, %c0_i32_0, %c0_i32_1 : i32, i32, i32
  }
  func.func @transform_5(%arg0: i32) -> (i32, i32) {
    %c0_i32 = arith.constant 0 : i32
    %c0_i32_0 = arith.constant 0 : i32
    %c0_i32_1 = arith.constant 0 : i32
    return %c0_i32, %c0_i32_0 : i32, i32
  }
  func.func @transform_6(%arg0: i32) -> (i32, i32) {
    %c0_i32 = arith.constant 0 : i32
    %c0_i32_0 = arith.constant 0 : i32
    %c0_i32_1 = arith.constant 0 : i32
    return %c0_i32, %c0_i32_0 : i32, i32
  }
  func.func @transform_7(%arg0: i32) -> (i32, i32) {
    %c0_i32 = arith.constant 0 : i32
    %c0_i32_0 = arith.constant 0 : i32
    return %arg0, %c0_i32 : i32, i32
  }
}

</mosaic_0001>

<llo_original>
// kernel: tpu_custom_call.1
$region0: #{tpu_custom_call.1}
  #allocation0 [shape = 'u32[]', space=smem, size = 0x4, offset = 0x4, fixed_abs, tag = 'smem constant byte address 0x4 - core index']
  #allocation1 [shape = 'u32[144,128]{1,0:T(1,128)}', space=vmem, size = 0x12000, scoped, tag = 'internal scratch']
  %s0 = inlined_call_operand.vmem [shape: f32[64,5], index: 0, kind: input, shape index: {}]
  %s1 = inlined_call_operand.vmem [shape: bf16[5,20], index: 1, kind: input, shape index: {}]
  %s2 = inlined_call_operand.vmem [shape: f32[1,20], index: 2, kind: input, shape index: {}]
  %s3 = inlined_call_operand.vmem [shape: bf16[4,20,20], index: 3, kind: input, shape index: {}]
  %s4 = inlined_call_operand.vmem [shape: f32[4,1,20], index: 4, kind: input, shape index: {}]
  %s5 = inlined_call_operand.vmem [shape: bf16[20,128], index: 5, kind: input, shape index: {}]
  %s6 = inlined_call_operand.vmem [shape: f32[1,128], index: 6, kind: input, shape index: {}]
  %s7 = inlined_call_operand.hbm [shape: f32[64,128], index: 7, kind: output, shape index: {}]
  %s8 = sld [smem:[#allocation0]]
  $region61: #{tpu_custom_call.1} parent=0
    _
  %s10 = ssub.s32 1, %s8
  %s11 = scalar_select 0, %s10, %s8
  $region1: #{tpu_custom_call.1} parent=0
    #allocation2 [shape = 'u8[16384]{0}', space=vmem, size = 0x4000, scoped, tag = 'output window, operand 0']
    #allocation3 [shape = 's32[2]{0}', space=sflag, size = 0x8, scoped, tag = 'scoped memory for tpu_custom_call.1']
    %12 = vsyncpa [#allocation3], 0
    %s13 = scalar_lea.sflag [#allocation3], 1
    %14 = vsyncpa %s13, 0
    loop: start=0, step=1, limit=6
    $region2: #{tpu_custom_call.1} parent=1 // loop_pre_header
      _
    $region3: #{tpu_custom_call.1} parent=1 // loop_header
      %s16 = sphi 0, %s20
      %p17 = scmp.ge.s32.totalorder %s16, 6
      %s26 = sphi 0, %s28
      %s29 = sphi 0, %s26
      %s30 = sphi 0, %s29
      %s46 = sphi 0, %s30
      %s50 = sphi 0, %s50
      %s52 = sphi 0, %s50
      %s53 = sphi 0, %s52
      %s67 = sphi 0, %s53
      %s71 = sphi 0, %s71
      %s73 = sphi 0, %s71
      %s74 = sphi 0, %s73
      %s88 = sphi 0, %s74
      %s92 = sphi 0, %s92
      %s94 = sphi 0, %s92
      %s95 = sphi 0, %s94
      %s109 = sphi 0, %s95
      %s113 = sphi 0, %s113
      %s115 = sphi 0, %s113
      %s116 = sphi 0, %s115
      %s130 = sphi 0, %s116
      %s134 = sphi 0, %s134
      %s136 = sphi 0, %s134
      %s137 = sphi 0, %s136
      %s151 = sphi 0, %s137
      %s155 = sphi 0, %s155
      %s157 = sphi 0, %s155
      %s158 = sphi 0, %s157
      %s172 = sphi 0, %s158
      %s178 = sphi 0, %s180
      %s181 = sphi 0, %s178
      %s182 = sphi 0, %s181
      %s198 = sphi 0, %s182
    $region4: #{tpu_custom_call.1} parent=1 // loop_header_branch
      %19 = sbr.rel (%p17) target = $region8
    $region5: #{tpu_custom_call.1} parent=1 // loop_body
      %s21 = ssub.s32 %s16, 1
      %s22 = ssub.s32 %s16, 2
      %s23 = sadd.s32 %s16, 1
      %s24 = ssub.s32 %s16, %s23
      %p25 = scmp.eq.s32.totalorder %s24, 0
      %s27 = sadd.s32 %s26, 1
      %s28 = scalar_select %p25, %s26, %s27
      %p31 = pneg %p25
      %p32 = scmp.eq.s32.totalorder %s16, 3
      %p33 = por %p31, %p32
      %p34 = scmp.ne.s32.totalorder %s26, %s29
      %p35 = scmp.eq.s32.totalorder %s16, 0
      %p36 = por %p34, %p35
      %p37 = scmp.ne.s32.totalorder %s26, %s29
      %p38 = scmp.eq.s32.totalorder %s21, 3
      %p39 = por %p37, %p38
      %p40 = scmp.ne.s32.totalorder %s29, %s30
      %p41 = scmp.eq.s32.totalorder %s21, 0
      %p42 = por %p40, %p41
      %p43 = scmp.ne.s32.totalorder %s29, %s30
      %p44 = scmp.eq.s32.totalorder %s22, 3
      %p45 = por %p43, %p44
      %p47 = scmp.ne.s32.totalorder %s30, %s46
      %p48 = scmp.eq.s32.totalorder %s22, 0
      %p49 = por %p47, %p48
      %s51 = sadd.s32 %s50, 1
      %p54 = scmp.eq.s32.totalorder %s16, 3
      %p55 = scmp.ne.s32.totalorder %s50, %s52
      %p56 = scmp.eq.s32.totalorder %s16, 0
      %p57 = por %p55, %p56
      %p58 = scmp.ne.s32.totalorder %s50, %s52
      %p59 = scmp.eq.s32.totalorder %s21, 3
      %p60 = por %p58, %p59
      %p61 = scmp.ne.s32.totalorder %s52, %s53
      %p62 = scmp.eq.s32.totalorder %s21, 0
      %p63 = por %p61, %p62
      %p64 = scmp.ne.s32.totalorder %s52, %s53
      %p65 = scmp.eq.s32.totalorder %s22, 3
      %p66 = por %p64, %p65
      %p68 = scmp.ne.s32.totalorder %s53, %s67
      %p69 = scmp.eq.s32.totalorder %s22, 0
      %p70 = por %p68, %p69
      %s72 = sadd.s32 %s71, 1
      %p75 = scmp.eq.s32.totalorder %s16, 3
      %p76 = scmp.ne.s32.totalorder %s71, %s73
      %p77 = scmp.eq.s32.totalorder %s16, 0
      %p78 = por %p76, %p77
      %p79 = scmp.ne.s32.totalorder %s71, %s73
      %p80 = scmp.eq.s32.totalorder %s21, 3
      %p81 = por %p79, %p80
      %p82 = scmp.ne.s32.totalorder %s73, %s74
      %p83 = scmp.eq.s32.totalorder %s21, 0
      %p84 = por %p82, %p83
      %p85 = scmp.ne.s32.totalorder %s73, %s74
      %p86 = scmp.eq.s32.totalorder %s22, 3
      %p87 = por %p85, %p86
      %p89 = scmp.ne.s32.totalorder %s74, %s88
      %p90 = scmp.eq.s32.totalorder %s22, 0
      %p91 = por %p89, %p90
      %s93 = sadd.s32 %s92, 1
      %p96 = scmp.eq.s32.totalorder %s16, 3
      %p97 = scmp.ne.s32.totalorder %s92, %s94
      %p98 = scmp.eq.s32.totalorder %s16, 0
      %p99 = por %p97, %p98
      %p100 = scmp.ne.s32.totalorder %s92, %s94
      %p101 = scmp.eq.s32.totalorder %s21, 3
      %p102 = por %p100, %p101
      %p103 = scmp.ne.s32.totalorder %s94, %s95
      %p104 = scmp.eq.s32.totalorder %s21, 0
      %p105 = por %p103, %p104
      %p106 = scmp.ne.s32.totalorder %s94, %s95
      %p107 = scmp.eq.s32.totalorder %s22, 3
      %p108 = por %p106, %p107
      %p110 = scmp.ne.s32.totalorder %s95, %s109
      %p111 = scmp.eq.s32.totalorder %s22, 0
      %p112 = por %p110, %p111
      %s114 = sadd.s32 %s113, 1
      %p117 = scmp.eq.s32.totalorder %s16, 3
      %p118 = scmp.ne.s32.totalorder %s113, %s115
      %p119 = scmp.eq.s32.totalorder %s16, 0
      %p120 = por %p118, %p119
      %p121 = scmp.ne.s32.totalorder %s113, %s115
      %p122 = scmp.eq.s32.totalorder %s21, 3
      %p123 = por %p121, %p122
      %p124 = scmp.ne.s32.totalorder %s115, %s116
      %p125 = scmp.eq.s32.totalorder %s21, 0
      %p126 = por %p124, %p125
      %p127 = scmp.ne.s32.totalorder %s115, %s116
      %p128 = scmp.eq.s32.totalorder %s22, 3
      %p129 = por %p127, %p128
      %p131 = scmp.ne.s32.totalorder %s116, %s130
      %p132 = scmp.eq.s32.totalorder %s22, 0
      %p133 = por %p131, %p132
      %s135 = sadd.s32 %s134, 1
      %p138 = scmp.eq.s32.totalorder %s16, 3
      %p139 = scmp.ne.s32.totalorder %s134, %s136
      %p140 = scmp.eq.s32.totalorder %s16, 0
      %p141 = por %p139, %p140
      %p142 = scmp.ne.s32.totalorder %s134, %s136
      %p143 = scmp.eq.s32.totalorder %s21, 3
      %p144 = por %p142, %p143
      %p145 = scmp.ne.s32.totalorder %s136, %s137
      %p146 = scmp.eq.s32.totalorder %s21, 0
      %p147 = por %p145, %p146
      %p148 = scmp.ne.s32.totalorder %s136, %s137
      %p149 = scmp.eq.s32.totalorder %s22, 3
      %p150 = por %p148, %p149
      %p152 = scmp.ne.s32.totalorder %s137, %s151
      %p153 = scmp.eq.s32.totalorder %s22, 0
      %p154 = por %p152, %p153
      %s156 = sadd.s32 %s155, 1
      %p159 = scmp.eq.s32.totalorder %s16, 3
      %p160 = scmp.ne.s32.totalorder %s155, %s157
      %p161 = scmp.eq.s32.totalorder %s16, 0
      %p162 = por %p160, %p161
      %p163 = scmp.ne.s32.totalorder %s155, %s157
      %p164 = scmp.eq.s32.totalorder %s21, 3
      %p165 = por %p163, %p164
      %p166 = scmp.ne.s32.totalorder %s157, %s158
      %p167 = scmp.eq.s32.totalorder %s21, 0
      %p168 = por %p166, %p167
      %p169 = scmp.ne.s32.totalorder %s157, %s158
      %p170 = scmp.eq.s32.totalorder %s22, 3
      %p171 = por %p169, %p170
      %p173 = scmp.ne.s32.totalorder %s158, %s172
      %p174 = scmp.eq.s32.totalorder %s22, 0
      %p175 = por %p173, %p174
      %s176 = ssub.s32 %s16, %s23
      %p177 = scmp.eq.s32.totalorder %s176, 0
      %s179 = sadd.s32 %s178, 1
      %s180 = scalar_select %p177, %s178, %s179
      %p183 = pneg %p177
      %p184 = scmp.eq.s32.totalorder %s16, 3
      %p185 = por %p183, %p184
      %p186 = scmp.ne.s32.totalorder %s178, %s181
      %p187 = scmp.eq.s32.totalorder %s16, 0
      %p188 = por %p186, %p187
      %p189 = scmp.ne.s32.totalorder %s178, %s181
      %p190 = scmp.eq.s32.totalorder %s21, 3
      %p191 = por %p189, %p190
      %p192 = scmp.ne.s32.totalorder %s181, %s182
      %p193 = scmp.eq.s32.totalorder %s21, 0
      %p194 = por %p192, %p193
      %p195 = scmp.ne.s32.totalorder %s181, %s182
      %p196 = scmp.eq.s32.totalorder %s22, 3
      %p197 = por %p195, %p196
      %p199 = scmp.ne.s32.totalorder %s182, %s198
      %p200 = scmp.eq.s32.totalorder %s22, 0
      %p201 = por %p199, %p200
      %p202 = scmp.le.s32.totalorder 1, %s16
      %p203 = scmp.lt.s32.totalorder %s16, 5
      %p204 = pnand %p202, %p203
      %p205 = pneg %p204
      // Predicated region
      $region9: #{tpu_custom_call.1} parent=5 // pred_check
        _
      $region10: #{tpu_custom_call.1} parent=5 // pred_check_branch
        %207 = sbr.rel (%p204) target = $region12
      $region11: #{tpu_custom_call.1} parent=5 // pred_region
        %s208 = ssub.s32 %s16, 1
        // Predicated region
        $region13: #{tpu_custom_call.1} parent=11 // pred_check
          %p209 = pneg %p63
        $region14: #{tpu_custom_call.1} parent=11 // pred_check_branch
          %211 = sbr.rel (%p209) target = $region16
        $region15: #{tpu_custom_call.1} parent=11 // pred_region
          _
        $region16: #{tpu_custom_call.1} parent=11 // pred_fallthru
          _
        // Predicated region
        $region17: #{tpu_custom_call.1} parent=11 // pred_check
          %p212 = pneg %p84
        $region18: #{tpu_custom_call.1} parent=11 // pred_check_branch
          %214 = sbr.rel (%p212) target = $region20
        $region19: #{tpu_custom_call.1} parent=11 // pred_region
          _
        $region20: #{tpu_custom_call.1} parent=11 // pred_fallthru
          _
        // Predicated region
        $region21: #{tpu_custom_call.1} parent=11 // pred_check
          %p215 = pneg %p105
        $region22: #{tpu_custom_call.1} parent=11 // pred_check_branch
          %217 = sbr.rel (%p215) target = $region24
        $region23: #{tpu_custom_call.1} parent=11 // pred_region
          _
        $region24: #{tpu_custom_call.1} parent=11 // pred_fallthru
          _
        // Predicated region
        $region25: #{tpu_custom_call.1} parent=11 // pred_check
          %p218 = pneg %p126
        $region26: #{tpu_custom_call.1} parent=11 // pred_check_branch
          %220 = sbr.rel (%p218) target = $region28
        $region27: #{tpu_custom_call.1} parent=11 // pred_region
          _
        $region28: #{tpu_custom_call.1} parent=11 // pred_fallthru
          _
        // Predicated region
        $region29: #{tpu_custom_call.1} parent=11 // pred_check
          %p221 = pneg %p147
        $region30: #{tpu_custom_call.1} parent=11 // pred_check_branch
          %223 = sbr.rel (%p221) target = $region32
        $region31: #{tpu_custom_call.1} parent=11 // pred_region
          _
        $region32: #{tpu_custom_call.1} parent=11 // pred_fallthru
          _
        // Predicated region
        $region33: #{tpu_custom_call.1} parent=11 // pred_check
          %p224 = pneg %p168
        $region34: #{tpu_custom_call.1} parent=11 // pred_check_branch
          %226 = sbr.rel (%p224) target = $region36
        $region35: #{tpu_custom_call.1} parent=11 // pred_region
          _
        $region36: #{tpu_custom_call.1} parent=11 // pred_fallthru
          _
      $region12: #{tpu_custom_call.1} parent=5 // pred_fallthru
        _
      %p227 = scmp.lt.s32.totalorder %s16, 4
      // Predicated region
      $region37: #{tpu_custom_call.1} parent=5 // pred_check
        %p228 = pneg %p227
      $region38: #{tpu_custom_call.1} parent=5 // pred_check_branch
        %230 = sbr.rel (%p228) target = $region40
      $region39: #{tpu_custom_call.1} parent=5 // pred_region
        // Predicated region
        $region41: #{tpu_custom_call.1} parent=39 // pred_check
          %p231 = pneg %p36
        $region42: #{tpu_custom_call.1} parent=39 // pred_check_branch
          %233 = sbr.rel (%p231) target = $region44
        $region43: #{tpu_custom_call.1} parent=39 // pred_region
          %s234 = smul.u32 2, %s16
          %p235 = scmp.lt.s32.totalorder %s234, 7
          %s236 = scalar_select %p235, %s234, 7
          %s237 = smul.addr %s236, 8
          %s238 = scalar_lea.vmem %s0, %s237
          %s239 = smul.u32 2, %s16
        $region44: #{tpu_custom_call.1} parent=39 // pred_fallthru
          _
      $region40: #{tpu_custom_call.1} parent=5 // pred_fallthru
        _
      %p240 = scmp.le.s32.totalorder 1, %s16
      %p241 = scmp.lt.s32.totalorder %s16, 5
      %p242 = pnand %p240, %p241
      %p243 = pneg %p242
      // Predicated region
      $region45: #{tpu_custom_call.1} parent=5 // pred_check
        _
      $region46: #{tpu_custom_call.1} parent=5 // pred_check_branch
        %245 = sbr.rel (%p242) target = $region48
      $region47: #{tpu_custom_call.1} parent=5 // pred_region
        %s246 = ssub.s32 %s16, 1
        %s247 = smul.u32 2, %s21
        %p248 = scmp.lt.s32.totalorder %s247, 7
        %s249 = scalar_select %p248, %s247, 7
        %s250 = smul.addr %s249, 8
        %s251 = scalar_lea.vmem %s0, %s250
        %p252 = pneg %p42
        %p253 = pneg %p39
        %p254 = pneg %p63
        %p255 = pneg %p60
        %p256 = pneg %p84
        %p257 = pneg %p81
        %p258 = pneg %p105
        %p259 = pneg %p102
        %p260 = pneg %p126
        %p261 = pneg %p123
        %p262 = pneg %p147
        %p263 = pneg %p144
        %p264 = pneg %p168
        %p265 = pneg %p165
        %p266 = pneg %p194
        %p267 = pneg %p191
        %s268 = sand.u32 %s181, 1
        %s269 = scalar_lea.sflag [#allocation3], %s268
        %s270 = sand.u32 %s181, 1
        %s271 = smul.addr %s270, 16
        %s272 = scalar_lea.vmem [#allocation2], %s271
        %s273 = smul.u32 2, %s21
        %p274 = scmp.lt.s32.totalorder %s273, 7
        %s275 = scalar_select %p274, %s273, 7
        %s276 = smul.addr %s275, 8
        %s277 = scalar_lea.vmem %s0, %s276
        %s278 = smul.u32 2, %s21
        %s279 = smul.u32 2, %s21
        %v281 = vld [vmem:[%s277] sm:$0xff]
        %v282 = vld [vmem:[%s277 + $0x8] sm:$0xff]
        %v283 = vpack.c.bf16 %v282, %v281
        %v284 = vld [vmem:[%s1] sm:$0x7]
        %v285 = vld [vmem:[%s2] sm:$0x1]
        %v287 = vlaneseq
        %v288 = vshrl.u32 %v287, 7
        %v289 = vsub.s32 0, %v288
        %v290 = vrot.slane %v285, %v289
        %vm292 = vcmask 39936
        %v294 = vsel %vm292, %v283, 0
        %vm296 = vcmask 1041408
        %vm297 = vcmask 1042432
        %v298 = vsel %vm296, 4294967295, 65535
        %v299 = vsel %vm297, %v298, 0
        %v301 = vand.u32 %v284, %v299
        %303 = vmatprep.subr.bf16.mxu0 0
        %304 = vmatpush1.bf16.msra.mxu0 %v301
        %305 = vmatprep.subr.bf16.mxu0 0
        %306 = vmatpush1.bf16.msra.mxu0 0
        %307 = vmatprep.subr.bf16.mxu0 0
        %308 = vmatpush1.bf16.msra.mxu0 0
        %309 = vmatprep.subr.bf16.mxu0 0
        %310 = vmatpush1.bf16.msra.mxu0 0
        %311 = vmatprep.subr.bf16.mxu0 0
        %312 = vmatpush1.bf16.msra.mxu0 0
        %313 = vmatprep.subr.bf16.mxu0 0
        %314 = vmatpush1.bf16.msra.mxu0 0
        %315 = vmatprep.subr.bf16.mxu0 0
        %316 = vmatpush1.bf16.msra.mxu0 0
        %317 = vmatprep.subr.bf16.mxu0 0
        %318 = vmatpush1.bf16.msra.mxu0 0
        %319 = vmatprep.subr.bf16.mxu0 0
        %320 = vmatpush1.bf16.msra.mxu0 0
        %321 = vmatprep.subr.bf16.mxu0 0
        %322 = vmatpush1.bf16.msra.mxu0 0
        %323 = vmatprep.subr.bf16.mxu0 0
        %324 = vmatpush1.bf16.msra.mxu0 0
        %325 = vmatprep.subr.bf16.mxu0 0
        %326 = vmatpush1.bf16.msra.mxu0 0
        %327 = vmatprep.subr.bf16.mxu0 0
        %328 = vmatpush1.bf16.msra.mxu0 0
        %329 = vmatprep.subr.bf16.mxu0 0
        %330 = vmatpush1.bf16.msra.mxu0 0
        %331 = vmatprep.subr.bf16.mxu0 0
        %332 = vmatpush1.bf16.msra.mxu0 0
        %333 = vmatprep.subr.bf16.mxu0 0
        %334 = vmatpush1.bf16.msra.mxu0 0
        %335 = vmatprep.mubr.bf16.mxu0 0
        %336 = vmatmul.mubr.bf16.gmra.mrb[0].mxu0 %v294
        %v337 = vpop.f32.mrb[0].mxu0
        %v338 = vadd.f32 %v290, %v337
        %v339 = vpop.f32.mrb[0].mxu0
        %v340 = vpop.f32.mrb[0].mxu0
        %v341 = vadd.f32 %v290, %v340
        %v342 = vpop.f32.mrb[0].mxu0
        %343 = vdwg.mxu0
        %v344 = vpack.c.bf16 %v341, %v338
        %v345 = vld [vmem:[%s3] sm:$0xf]
        %v346 = vld [vmem:[%s3 + $0x4] sm:$0xf]
        %v347 = vld [vmem:[%s3 + $0x8] sm:$0x3]
        %v348 = vld [vmem:[%s4] sm:$0x1]
        %v350 = vlaneseq
        %v351 = vshrl.u32 %v350, 7
        %v352 = vsub.s32 0, %v351
        %v353 = vrot.slane %v348, %v352
        %v358 = vunpack.c.l.b16 %v345
        %v359 = vunpack.c.l.b16 %v346
        %v360 = vunpack.c.l.b16 %v347
        %v361 = vpack.c.b16 %v359, %v358
        %v362 = vpack.c.b16 %v360, %v360
        %vm364 = vcmask 162816
        %v366 = vsel %vm364, %v344, 0
        %v369 = vsel %vm296, %v362, 0
        %371 = vmatprep.subr.bf16.mxu0 0
        %372 = vmatpush1.bf16.msra.mxu0 %v361
        %373 = vmatprep.subr.bf16.mxu0 0
        %374 = vmatpush1.bf16.msra.mxu0 %v369
        %375 = vmatprep.subr.bf16.mxu0 0
        %376 = vmatpush1.bf16.msra.mxu0 0
        %377 = vmatprep.subr.bf16.mxu0 0
        %378 = vmatpush1.bf16.msra.mxu0 0
        %379 = vmatprep.subr.bf16.mxu0 0
        %380 = vmatpush1.bf16.msra.mxu0 0
        %381 = vmatprep.subr.bf16.mxu0 0
        %382 = vmatpush1.bf16.msra.mxu0 0
        %383 = vmatprep.subr.bf16.mxu0 0
        %384 = vmatpush1.bf16.msra.mxu0 0
        %385 = vmatprep.subr.bf16.mxu0 0
        %386 = vmatpush1.bf16.msra.mxu0 0
        %387 = vmatprep.subr.bf16.mxu0 0
        %388 = vmatpush1.bf16.msra.mxu0 0
        %389 = vmatprep.subr.bf16.mxu0 0
        %390 = vmatpush1.bf16.msra.mxu0 0
        %391 = vmatprep.subr.bf16.mxu0 0
        %392 = vmatpush1.bf16.msra.mxu0 0
        %393 = vmatprep.subr.bf16.mxu0 0
        %394 = vmatpush1.bf16.msra.mxu0 0
        %395 = vmatprep.subr.bf16.mxu0 0
        %396 = vmatpush1.bf16.msra.mxu0 0
        %397 = vmatprep.subr.bf16.mxu0 0
        %398 = vmatpush1.bf16.msra.mxu0 0
        %399 = vmatprep.subr.bf16.mxu0 0
        %400 = vmatpush1.bf16.msra.mxu0 0
        %401 = vmatprep.subr.bf16.mxu0 0
        %402 = vmatpush1.bf16.msra.mxu0 0
        %403 = vmatprep.mubr.bf16.mxu0 0
        %404 = vmatmul.mubr.bf16.gmra.mrb[0].mxu0 %v366
        %v405 = vpop.f32.mrb[0].mxu0
        %v406 = vadd.f32 %v353, %v405
        %v407 = vpop.f32.mrb[0].mxu0
        %v408 = vpop.f32.mrb[0].mxu0
        %v409 = vadd.f32 %v353, %v408
        %v410 = vpop.f32.mrb[0].mxu0
        %411 = vdwg.mxu0
        %v412 = vmax.f32 %v406, 0.0
        %v413 = vmax.f32 %v409, 0.0
        %v414 = vpack.c.bf16 %v413, %v412
        %s415 = scalar_lea.vmem %s3, 12
        %v416 = vld [vmem:[%s415] sm:$0xf]
        %v417 = vld [vmem:[%s415 + $0x4] sm:$0xf]
        %v418 = vld [vmem:[%s415 + $0x8] sm:$0x3]
        %s419 = scalar_lea.vmem %s4, 1
        %v420 = vld [vmem:[%s419] sm:$0x1]
        %v422 = vlaneseq
        %v423 = vshrl.u32 %v422, 7
        %v424 = vsub.s32 0, %v423
        %v425 = vrot.slane %v420, %v424
        %v430 = vunpack.c.l.b16 %v416
        %v431 = vunpack.c.l.b16 %v417
        %v432 = vunpack.c.l.b16 %v418
        %v433 = vpack.c.b16 %v431, %v430
        %v434 = vpack.c.b16 %v432, %v432
        %v437 = vsel %vm364, %v414, 0
        %v440 = vsel %vm296, %v434, 0
        %442 = vmatprep.subr.bf16.mxu0 0
        %443 = vmatpush1.bf16.msra.mxu0 %v433
        %444 = vmatprep.subr.bf16.mxu0 0
        %445 = vmatpush1.bf16.msra.mxu0 %v440
        %446 = vmatprep.subr.bf16.mxu0 0
        %447 = vmatpush1.bf16.msra.mxu0 0
        %448 = vmatprep.subr.bf16.mxu0 0
        %449 = vmatpush1.bf16.msra.mxu0 0
        %450 = vmatprep.subr.bf16.mxu0 0
        %451 = vmatpush1.bf16.msra.mxu0 0
        %452 = vmatprep.subr.bf16.mxu0 0
        %453 = vmatpush1.bf16.msra.mxu0 0
        %454 = vmatprep.subr.bf16.mxu0 0
        %455 = vmatpush1.bf16.msra.mxu0 0
        %456 = vmatprep.subr.bf16.mxu0 0
        %457 = vmatpush1.bf16.msra.mxu0 0
        %458 = vmatprep.subr.bf16.mxu0 0
        %459 = vmatpush1.bf16.msra.mxu0 0
        %460 = vmatprep.subr.bf16.mxu0 0
        %461 = vmatpush1.bf16.msra.mxu0 0
        %462 = vmatprep.subr.bf16.mxu0 0
        %463 = vmatpush1.bf16.msra.mxu0 0
        %464 = vmatprep.subr.bf16.mxu0 0
        %465 = vmatpush1.bf16.msra.mxu0 0
        %466 = vmatprep.subr.bf16.mxu0 0
        %467 = vmatpush1.bf16.msra.mxu0 0
        %468 = vmatprep.subr.bf16.mxu0 0
        %469 = vmatpush1.bf16.msra.mxu0 0
        %470 = vmatprep.subr.bf16.mxu0 0
        %471 = vmatpush1.bf16.msra.mxu0 0
        %472 = vmatprep.subr.bf16.mxu0 0
        %473 = vmatpush1.bf16.msra.mxu0 0
        %474 = vmatprep.mubr.bf16.mxu0 0
        %475 = vmatmul.mubr.bf16.gmra.mrb[0].mxu0 %v437
        %v476 = vpop.f32.mrb[0].mxu0
        %v477 = vadd.f32 %v425, %v476
        %v478 = vpop.f32.mrb[0].mxu0
        %v479 = vpop.f32.mrb[0].mxu0
        %v480 = vadd.f32 %v425, %v479
        %v481 = vpop.f32.mrb[0].mxu0
        %482 = vdwg.mxu0
        %v483 = vmax.f32 %v477, 0.0
        %v484 = vmax.f32 %v480, 0.0
        %v485 = vpack.c.bf16 %v484, %v483
        %s486 = scalar_lea.vmem %s3, 24
        %v487 = vld [vmem:[%s486] sm:$0xf]
        %v488 = vld [vmem:[%s486 + $0x4] sm:$0xf]
        %v489 = vld [vmem:[%s486 + $0x8] sm:$0x3]
        %s490 = scalar_lea.vmem %s4, 2
        %v491 = vld [vmem:[%s490] sm:$0x1]
        %v493 = vlaneseq
        %v494 = vshrl.u32 %v493, 7
        %v495 = vsub.s32 0, %v494
        %v496 = vrot.slane %v491, %v495
        %v501 = vunpack.c.l.b16 %v487
        %v502 = vunpack.c.l.b16 %v488
        %v503 = vunpack.c.l.b16 %v489
        %v504 = vpack.c.b16 %v502, %v501
        %v505 = vpack.c.b16 %v503, %v503
        %v508 = vsel %vm364, %v485, 0
        %v511 = vsel %vm296, %v505, 0
        %513 = vmatprep.subr.bf16.mxu0 0
        %514 = vmatpush1.bf16.msra.mxu0 %v504
        %515 = vmatprep.subr.bf16.mxu0 0
        %516 = vmatpush1.bf16.msra.mxu0 %v511
        %517 = vmatprep.subr.bf16.mxu0 0
        %518 = vmatpush1.bf16.msra.mxu0 0
        %519 = vmatprep.subr.bf16.mxu0 0
        %520 = vmatpush1.bf16.msra.mxu0 0
        %521 = vmatprep.subr.bf16.mxu0 0
        %522 = vmatpush1.bf16.msra.mxu0 0
        %523 = vmatprep.subr.bf16.mxu0 0
        %524 = vmatpush1.bf16.msra.mxu0 0
        %525 = vmatprep.subr.bf16.mxu0 0
        %526 = vmatpush1.bf16.msra.mxu0 0
        %527 = vmatprep.subr.bf16.mxu0 0
        %528 = vmatpush1.bf16.msra.mxu0 0
        %529 = vmatprep.subr.bf16.mxu0 0
        %530 = vmatpush1.bf16.msra.mxu0 0
        %531 = vmatprep.subr.bf16.mxu0 0
        %532 = vmatpush1.bf16.msra.mxu0 0
        %533 = vmatprep.subr.bf16.mxu0 0
        %534 = vmatpush1.bf16.msra.mxu0 0
        %535 = vmatprep.subr.bf16.mxu0 0
        %536 = vmatpush1.bf16.msra.mxu0 0
        %537 = vmatprep.subr.bf16.mxu0 0
        %538 = vmatpush1.bf16.msra.mxu0 0
        %539 = vmatprep.subr.bf16.mxu0 0
        %540 = vmatpush1.bf16.msra.mxu0 0
        %541 = vmatprep.subr.bf16.mxu0 0
        %542 = vmatpush1.bf16.msra.mxu0 0
        %543 = vmatprep.subr.bf16.mxu0 0
        %544 = vmatpush1.bf16.msra.mxu0 0
        %545 = vmatprep.mubr.bf16.mxu0 0
        %546 = vmatmul.mubr.bf16.gmra.mrb[0].mxu0 %v508
        %v547 = vpop.f32.mrb[0].mxu0
        %v548 = vadd.f32 %v496, %v547
        %v549 = vpop.f32.mrb[0].mxu0
        %v550 = vpop.f32.mrb[0].mxu0
        %v551 = vadd.f32 %v496, %v550
        %v552 = vpop.f32.mrb[0].mxu0
        %553 = vdwg.mxu0
        %v554 = vmax.f32 %v548, 0.0
        %v555 = vmax.f32 %v551, 0.0
        %v556 = vpack.c.bf16 %v555, %v554
        %s557 = scalar_lea.vmem %s3, 36
        %v558 = vld [vmem:[%s557] sm:$0xf]
        %v559 = vld [vmem:[%s557 + $0x4] sm:$0xf]
        %v560 = vld [vmem:[%s557 + $0x8] sm:$0x3]
        %s561 = scalar_lea.vmem %s4, 3
        %v562 = vld [vmem:[%s561] sm:$0x1]
        %v564 = vlaneseq
        %v565 = vshrl.u32 %v564, 7
        %v566 = vsub.s32 0, %v565
        %v567 = vrot.slane %v562, %v566
        %v572 = vunpack.c.l.b16 %v558
        %v573 = vunpack.c.l.b16 %v559
        %v574 = vunpack.c.l.b16 %v560
        %v575 = vpack.c.b16 %v573, %v572
        %v576 = vpack.c.b16 %v574, %v574
        %v579 = vsel %vm364, %v556, 0
        %v582 = vsel %vm296, %v576, 0
        %584 = vmatprep.subr.bf16.mxu0 0
        %585 = vmatpush1.bf16.msra.mxu0 %v575
        %586 = vmatprep.subr.bf16.mxu0 0
        %587 = vmatpush1.bf16.msra.mxu0 %v582
        %588 = vmatprep.subr.bf16.mxu0 0
        %589 = vmatpush1.bf16.msra.mxu0 0
        %590 = vmatprep.subr.bf16.mxu0 0
        %591 = vmatpush1.bf16.msra.mxu0 0
        %592 = vmatprep.subr.bf16.mxu0 0
        %593 = vmatpush1.bf16.msra.mxu0 0
        %594 = vmatprep.subr.bf16.mxu0 0
        %595 = vmatpush1.bf16.msra.mxu0 0
        %596 = vmatprep.subr.bf16.mxu0 0
        %597 = vmatpush1.bf16.msra.mxu0 0
        %598 = vmatprep.subr.bf16.mxu0 0
        %599 = vmatpush1.bf16.msra.mxu0 0
        %600 = vmatprep.subr.bf16.mxu0 0
        %601 = vmatpush1.bf16.msra.mxu0 0
        %602 = vmatprep.subr.bf16.mxu0 0
        %603 = vmatpush1.bf16.msra.mxu0 0
        %604 = vmatprep.subr.bf16.mxu0 0
        %605 = vmatpush1.bf16.msra.mxu0 0
        %606 = vmatprep.subr.bf16.mxu0 0
        %607 = vmatpush1.bf16.msra.mxu0 0
        %608 = vmatprep.subr.bf16.mxu0 0
        %609 = vmatpush1.bf16.msra.mxu0 0
        %610 = vmatprep.subr.bf16.mxu0 0
        %611 = vmatpush1.bf16.msra.mxu0 0
        %612 = vmatprep.subr.bf16.mxu0 0
        %613 = vmatpush1.bf16.msra.mxu0 0
        %614 = vmatprep.subr.bf16.mxu0 0
        %615 = vmatpush1.bf16.msra.mxu0 0
        %616 = vmatprep.mubr.bf16.mxu0 0
        %617 = vmatmul.mubr.bf16.gmra.mrb[0].mxu0 %v579
        %v618 = vpop.f32.mrb[0].mxu0
        %v619 = vadd.f32 %v567, %v618
        %v620 = vpop.f32.mrb[0].mxu0
        %v621 = vpop.f32.mrb[0].mxu0
        %v622 = vadd.f32 %v567, %v621
        %v623 = vpop.f32.mrb[0].mxu0
        %624 = vdwg.mxu0
        %v625 = vmax.f32 %v619, 0.0
        %v626 = vmax.f32 %v622, 0.0
        %v627 = vpack.c.bf16 %v626, %v625
        %v628 = vld [vmem:[%s5] sm:$0xf]
        %v629 = vld [vmem:[%s5 + $0x4] sm:$0xf]
        %v630 = vld [vmem:[%s5 + $0x8] sm:$0x3]
        %v631 = vld [vmem:[%s6] sm:$0x1]
        %v633 = vlaneseq
        %v634 = vshrl.u32 %v633, 7
        %v635 = vsub.s32 0, %v634
        %v636 = vrot.slane %v631, %v635
        %v641 = vunpack.c.l.b16 %v628
        %v642 = vunpack.c.l.b16 %v629
        %v643 = vunpack.c.l.b16 %v630
        %v644 = vpack.c.b16 %v642, %v641
        %v645 = vpack.c.b16 %v643, %v643
        %v648 = vsel %vm364, %v627, 0
        %v651 = vsel %vm296, %v645, 0
        %653 = vmatprep.subr.bf16.mxu0 0
        %654 = vmatpush1.bf16.msra.mxu0 %v644
        %655 = vmatprep.subr.bf16.mxu0 0
        %656 = vmatpush1.bf16.msra.mxu0 %v651
        %657 = vmatprep.subr.bf16.mxu0 0
        %658 = vmatpush1.bf16.msra.mxu0 0
        %659 = vmatprep.subr.bf16.mxu0 0
        %660 = vmatpush1.bf16.msra.mxu0 0
        %661 = vmatprep.subr.bf16.mxu0 0
        %662 = vmatpush1.bf16.msra.mxu0 0
        %663 = vmatprep.subr.bf16.mxu0 0
        %664 = vmatpush1.bf16.msra.mxu0 0
        %665 = vmatprep.subr.bf16.mxu0 0
        %666 = vmatpush1.bf16.msra.mxu0 0
        %667 = vmatprep.subr.bf16.mxu0 0
        %668 = vmatpush1.bf16.msra.mxu0 0
        %669 = vmatprep.subr.bf16.mxu0 0
        %670 = vmatpush1.bf16.msra.mxu0 0
        %671 = vmatprep.subr.bf16.mxu0 0
        %672 = vmatpush1.bf16.msra.mxu0 0
        %673 = vmatprep.subr.bf16.mxu0 0
        %674 = vmatpush1.bf16.msra.mxu0 0
        %675 = vmatprep.subr.bf16.mxu0 0
        %676 = vmatpush1.bf16.msra.mxu0 0
        %677 = vmatprep.subr.bf16.mxu0 0
        %678 = vmatpush1.bf16.msra.mxu0 0
        %679 = vmatprep.subr.bf16.mxu0 0
        %680 = vmatpush1.bf16.msra.mxu0 0
        %681 = vmatprep.subr.bf16.mxu0 0
        %682 = vmatpush1.bf16.msra.mxu0 0
        %683 = vmatprep.subr.bf16.mxu0 0
        %684 = vmatpush1.bf16.msra.mxu0 0
        %685 = vmatprep.mubr.bf16.mxu0 0
        %686 = vmatmul.mubr.bf16.gmra.mrb[0].mxu0 %v648
        %v687 = vpop.f32.mrb[0].mxu0
        %v688 = vadd.f32 %v636, %v687
        %v689 = vpop.f32.mrb[0].mxu0
        %v690 = vpop.f32.mrb[0].mxu0
        %v691 = vadd.f32 %v636, %v690
        %v692 = vpop.f32.mrb[0].mxu0
        %693 = vdwg.mxu0
        %v694 = vcvt.f32.s32.to.zero.pseudo %v281
        %v695 = vcvt.f32.s32.to.zero.pseudo %v282
        %v696 = vlaneseq
        %v697 = vand.u32 %v696, 127
        %698 = vset.pattern.permute.xlu0 4
        %699 = vperm.xlu0 %698, %v694
        %v700 = vpop.permute.xlu0 %699
        %701 = vset.pattern.permute.xlu0 4
        %702 = vperm.xlu0 %701, %v695
        %v703 = vpop.permute.xlu0 %702
        %vm704 = vcmp.ge.s32.totalorder %v697, %v700
        %vm705 = vcmp.ge.s32.totalorder %v697, %v703
        %v706 = vsel %vm704, -inf, %v688
        %v707 = vsel %vm705, -inf, %v691
        %708 = vst [vmem:[%s272] sm:$0xff] %v706
        %709 = vst [vmem:[%s272 + $0x8] sm:$0xff] %v707
        %s710 = sand.u32 %s181, 1
        %s711 = scalar_lea.sflag [#allocation3], %s710
        %s712 = sand.u32 %s181, 1
        %s713 = smul.addr %s712, 16
        %s714 = scalar_lea.vmem [#allocation2], %s713
        // Predicated region
        $region49: #{tpu_custom_call.1} parent=47 // pred_check
          %p715 = pneg %p191
        $region50: #{tpu_custom_call.1} parent=47 // pred_check_branch
          %717 = sbr.rel (%p715) target = $region52
        $region51: #{tpu_custom_call.1} parent=47 // pred_region
          %s718 = smul.u32 2, %s21
          %s720 = ssub.s32 256, 256
          %721 = vsyncadd %s711, %s720
          %s722 = smul.addr %s718, 128
          %s723 = scalar_lea.hbm %s7, %s722
          %s724 = sshll.u32 %s714, 4
          %s725 = int_to_ptr.vmem [resolvable:$true] %s724
          %730 = dma.vmem_to_hbm [thread:$0]  %s725, 256, %s723, %s711, 128, 128, 8
        $region52: #{tpu_custom_call.1} parent=47 // pred_fallthru
          _
      $region48: #{tpu_custom_call.1} parent=5 // pred_fallthru
        _
      %p731 = scmp.le.s32.totalorder 2, %s16
      // Predicated region
      $region53: #{tpu_custom_call.1} parent=5 // pred_check
        %p732 = pneg %p731
      $region54: #{tpu_custom_call.1} parent=5 // pred_check_branch
        %734 = sbr.rel (%p732) target = $region56
      $region55: #{tpu_custom_call.1} parent=5 // pred_region
        %s735 = ssub.s32 %s16, 2
        // Predicated region
        $region57: #{tpu_custom_call.1} parent=55 // pred_check
          %p736 = pneg %p197
        $region58: #{tpu_custom_call.1} parent=55 // pred_check_branch
          %738 = sbr.rel (%p736) target = $region60
        $region59: #{tpu_custom_call.1} parent=55 // pred_region
          %s739 = sand.u32 %s182, 1
          %s740 = scalar_lea.sflag [#allocation3], %s739
          %s741 = sand.u32 %s182, 1
          %s742 = smul.addr %s741, 16
          %s743 = scalar_lea.vmem [#allocation2], %s742
          %744 = dma.done %s740, 256
        $region60: #{tpu_custom_call.1} parent=55 // pred_fallthru
          _
      $region56: #{tpu_custom_call.1} parent=5 // pred_fallthru
        _
    $region6: #{tpu_custom_call.1} parent=1 // loop_footer
      %s20 = sadd.s32 1, %s16
    $region7: #{tpu_custom_call.1} parent=1 // loop_footer_branch
      %15 = sbr.rel target = $region3
    $region8: #{tpu_custom_call.1} parent=1 // loop_exit
      _
    %745 = vsyncpa [#allocation3], 1
    %s746 = scalar_lea.sflag [#allocation3], 1
    %747 = vsyncpa %s746, 1

</llo_original>
